<compile_context>
chip_gen: v7x
topology: tpu7x:2x2x1
jax: 0.10.0
libtpu: 0.0.40
codegen_flags: <defaults>
</compile_context>

<pallas_src>
import jax
import jax.numpy as jnp
from jax.experimental import pallas as pl
from jax.experimental.pallas import tpu as pltpu


def _round_up(n, m):
    return ((n + m - 1) // m) * m


def _mlp_kernel(x_ref,
                w1_ref, b1_ref,
                w2_ref, b2_ref,
                w3_ref, b3_ref,
                w4_ref, b4_ref,
                o_ref):
    """One batch tile: x (TB, D) f32 -> o (TB, 1) f32. bf16 MXU ops, f32 accum."""
    x = x_ref[...].astype(jnp.bfloat16)                        # in-kernel cast

    h = jnp.dot(x, w1_ref[...],
                preferred_element_type=jnp.float32) + b1_ref[...]
    h = jnp.maximum(h, 0.0)                                    # relu(layer1)

    h = jnp.dot(h.astype(jnp.bfloat16), w2_ref[...],
                preferred_element_type=jnp.float32) + b2_ref[...]
    h = jnp.maximum(h, 0.0)                                    # relu(layer2)

    h = jnp.dot(h.astype(jnp.bfloat16), w3_ref[...],
                preferred_element_type=jnp.float32) + b3_ref[...]
    h = jnp.maximum(h, 0.0)                                    # relu(layer3)

    # output_layer (32 -> 1): VPU multiply + cross-lane reduce (frees the MXU).
    out = jnp.sum(h * w4_ref[...], axis=-1, keepdims=True) + b4_ref[...]
    o_ref[...] = out.astype(o_ref.dtype)                       # no activation


def race_outcome_predictor(x, params, *, block_rows=1024):
    """Forward pass. x: [B, input_dim] float. params: dict of (w, b) per layer,
    weights laid out as [in, out] (PyTorch Linear weights must be pre-transposed)."""
    B, D = x.shape
    w1, b1 = params["layer1"]
    w2, b2 = params["layer2"]
    w3, b3 = params["layer3"]
    w4, b4 = params["output_layer"]

    # Batch tile: large enough to amortize per-step overhead (~0.35 us/step),
    # multiple of 8 (f32 sublanes).  For TB=1024: f32 x tile (double-buffered)
    # + f32 h1/h2/h3 intermediates stay well under the default scoped VMEM
    # (16 MiB v5e / 32 MiB v6e, v7x) for any reasonable input_dim.
    TB = min(block_rows, _round_up(B, 8))
    TB = _round_up(TB, 8)
    B_pad = _round_up(B, TB)

    x_p = jnp.pad(x, ((0, B_pad - B), (0, 0))) if B_pad != B else x
    x_p = x_p.astype(jnp.float32)

    # bf16 for the MXU weight operands (cast once, VMEM-resident);
    # biases + final row vector stay f32.
    w1b = w1.astype(jnp.bfloat16)
    w2b = w2.astype(jnp.bfloat16)
    w3b = w3.astype(jnp.bfloat16)
    w4_row = w4.reshape(1, w4.shape[0]).astype(jnp.float32)     # (1, 32)
    b1f, b2f, b3f, b4f = (b.astype(jnp.float32) for b in (b1, b2, b3, b4))

    grid = (B_pad // TB,)

    weight_bytes = sum(int(a.size) * a.dtype.itemsize
                       for a in (w1b, w2b, w3b, w4_row, b1f, b2f, b3f, b4f))
    cost = pl.CostEstimate(
        flops=2 * B_pad * (D * 128 + 128 * 64 + 64 * 32 + 32),
        transcendentals=0,
        bytes_accessed=B_pad * D * 4 + weight_bytes + B_pad * 4,
    )

    const = lambda i: (0, 0)            # weights/biases: same block every step
    out = pl.pallas_call(
        _mlp_kernel,
        out_shape=jax.ShapeDtypeStruct((B_pad, 1), jnp.float32),
        grid=grid,
        in_specs=[
            pl.BlockSpec((TB, D), lambda i: (i, 0)),            # x tile
            pl.BlockSpec(w1b.shape, const),
            pl.BlockSpec(b1f.shape, const),
            pl.BlockSpec(w2b.shape, const),
            pl.BlockSpec(b2f.shape, const),
            pl.BlockSpec(w3b.shape, const),
            pl.BlockSpec(b3f.shape, const),
            pl.BlockSpec(w4_row.shape, const),
            pl.BlockSpec(b4f.shape, const),
        ],
        out_specs=pl.BlockSpec((TB, 1), lambda i: (i, 0)),
        compiler_params=pltpu.CompilerParams(
            dimension_semantics=("parallel",)),                 # megacore on v7x
        cost_estimate=cost,
    )(x_p, w1b, b1f, w2b, b2f, w3b, b3f, w4_row, b4f)

    return out[:B]


def init_params(key, input_dim):
    """Deterministic init mimicking nn.Linear's U(-1/sqrt(in), 1/sqrt(in))."""
    dims = [(input_dim, 128), (128, 64), (64, 32), (32, 1)]
    names = ["layer1", "layer2", "layer3", "output_layer"]
    params = {}
    for name, (din, dout) in zip(names, dims):
        key, kw, kb = jax.random.split(key, 3)
        bound = 1.0 / (din ** 0.5)
        w = jax.random.uniform(kw, (din, dout), jnp.float32, -bound, bound)
        b = jax.random.uniform(kb, (1, dout), jnp.float32, -bound, bound)
        params[name] = (w, b)
    return params


def _reference_forward(x, params):
    h = x
    for name in ["layer1", "layer2", "layer3"]:
        w, b = params[name]
        h = jnp.maximum(h @ w + b, 0.0)
    w, b = params["output_layer"]
    return h @ w + b


if __name__ == "__main__":
    key = jax.random.PRNGKey(0)
    k_in, k_param = jax.random.split(key)

    batch, input_dim = 8, 32
    x = jax.random.normal(k_in, (batch, input_dim), jnp.float32)
    params = init_params(k_param, input_dim)

    out = race_outcome_predictor(x, params)
    out = jax.block_until_ready(out)

    ref = _reference_forward(x, params)            # f32 reference
    assert out.shape == (batch, 1)
    # bf16 MXU operands -> looser tolerance than a pure-f32 path.
    assert jnp.allclose(out, ref, atol=5e-2, rtol=5e-2), (
        f"max abs diff {jnp.max(jnp.abs(out - ref))}")
    print("KERNEL_OK")
</pallas_src>

<mosaic_0001>
module attributes {stable_mosaic.version = 11 : i64} {
  func.func @_mlp_kernel(%arg0: i32, %arg1: memref<8x32xf32, #tpu.memory_space<vmem>>, %arg2: memref<32x128xbf16, #tpu.memory_space<vmem>>, %arg3: memref<1x128xf32, #tpu.memory_space<vmem>>, %arg4: memref<128x64xbf16, #tpu.memory_space<vmem>>, %arg5: memref<1x64xf32, #tpu.memory_space<vmem>>, %arg6: memref<64x32xbf16, #tpu.memory_space<vmem>>, %arg7: memref<1x32xf32, #tpu.memory_space<vmem>>, %arg8: memref<1x32xf32, #tpu.memory_space<vmem>>, %arg9: memref<1x1xf32, #tpu.memory_space<vmem>>, %arg10: memref<8x1xf32, #tpu.memory_space<vmem>>) attributes {dimension_semantics = [#tpu.dimension_semantics<parallel>], iteration_bounds = array<i64: 1>, scalar_prefetch = 0 : i64, scratch_operands = 0 : i64, tpu.core_type = #tpu.core_type<tc>, window_params = [{transform_indices = @transform_0, window_bounds = array<i64: 8, 32>}, {pipeline_mode = #tpu.pipeline_mode<synchronous>, transform_indices = @transform_1, window_bounds = array<i64: 32, 128>}, {pipeline_mode = #tpu.pipeline_mode<synchronous>, transform_indices = @transform_2, window_bounds = array<i64: 1, 128>}, {pipeline_mode = #tpu.pipeline_mode<synchronous>, transform_indices = @transform_3, window_bounds = array<i64: 128, 64>}, {pipeline_mode = #tpu.pipeline_mode<synchronous>, transform_indices = @transform_4, window_bounds = array<i64: 1, 64>}, {pipeline_mode = #tpu.pipeline_mode<synchronous>, transform_indices = @transform_5, window_bounds = array<i64: 64, 32>}, {pipeline_mode = #tpu.pipeline_mode<synchronous>, transform_indices = @transform_6, window_bounds = array<i64: 1, 32>}, {pipeline_mode = #tpu.pipeline_mode<synchronous>, transform_indices = @transform_7, window_bounds = array<i64: 1, 32>}, {pipeline_mode = #tpu.pipeline_mode<synchronous>, transform_indices = @transform_8, window_bounds = array<i64: 1, 1>}, {transform_indices = @transform_9, window_bounds = array<i64: 8, 1>}]} {
    %c0 = arith.constant 0 : index
    %c0_0 = arith.constant 0 : index
    %0 = vector.load %arg1[%c0, %c0_0] : memref<8x32xf32, #tpu.memory_space<vmem>>, vector<8x32xf32>
    %1 = arith.truncf %0 : vector<8x32xf32> to vector<8x32xbf16>
    %c0_1 = arith.constant 0 : index
    %c0_2 = arith.constant 0 : index
    %2 = vector.load %arg2[%c0_1, %c0_2] : memref<32x128xbf16, #tpu.memory_space<vmem>>, vector<32x128xbf16>
    %cst = arith.constant dense<0.000000e+00> : vector<8x128xf32>
    %3 = tpu.matmul %1, %2, %cst {dimension_numbers = #tpu.dot_dimension_numbers<[1], [0], [0], [1], [0, 0, 1, 1], [], []>} : vector<8x32xbf16>, vector<32x128xbf16>, vector<8x128xf32> -> vector<8x128xf32>
    %c0_3 = arith.constant 0 : index
    %c0_4 = arith.constant 0 : index
    %4 = vector.load %arg3[%c0_3, %c0_4] : memref<1x128xf32, #tpu.memory_space<vmem>>, vector<1x128xf32>
    %5 = vector.broadcast %4 : vector<1x128xf32> to vector<8x128xf32>
    %6 = arith.addf %3, %5 : vector<8x128xf32>
    %cst_5 = arith.constant 0.000000e+00 : f32
    %7 = vector.broadcast %cst_5 : f32 to vector<8x128xf32>
    %8 = arith.maximumf %6, %7 : vector<8x128xf32>
    %9 = arith.truncf %8 : vector<8x128xf32> to vector<8x128xbf16>
    %c0_6 = arith.constant 0 : index
    %c0_7 = arith.constant 0 : index
    %10 = vector.load %arg4[%c0_6, %c0_7] : memref<128x64xbf16, #tpu.memory_space<vmem>>, vector<128x64xbf16>
    %cst_8 = arith.constant dense<0.000000e+00> : vector<8x64xf32>
    %11 = tpu.matmul %9, %10, %cst_8 {dimension_numbers = #tpu.dot_dimension_numbers<[1], [0], [0], [1], [0, 0, 1, 1], [], []>} : vector<8x128xbf16>, vector<128x64xbf16>, vector<8x64xf32> -> vector<8x64xf32>
    %c0_9 = arith.constant 0 : index
    %c0_10 = arith.constant 0 : index
    %12 = vector.load %arg5[%c0_9, %c0_10] : memref<1x64xf32, #tpu.memory_space<vmem>>, vector<1x64xf32>
    %13 = vector.broadcast %12 : vector<1x64xf32> to vector<8x64xf32>
    %14 = arith.addf %11, %13 : vector<8x64xf32>
    %cst_11 = arith.constant 0.000000e+00 : f32
    %15 = vector.broadcast %cst_11 : f32 to vector<8x64xf32>
    %16 = arith.maximumf %14, %15 : vector<8x64xf32>
    %17 = arith.truncf %16 : vector<8x64xf32> to vector<8x64xbf16>
    %c0_12 = arith.constant 0 : index
    %c0_13 = arith.constant 0 : index
    %18 = vector.load %arg6[%c0_12, %c0_13] : memref<64x32xbf16, #tpu.memory_space<vmem>>, vector<64x32xbf16>
    %cst_14 = arith.constant dense<0.000000e+00> : vector<8x32xf32>
    %19 = tpu.matmul %17, %18, %cst_14 {dimension_numbers = #tpu.dot_dimension_numbers<[1], [0], [0], [1], [0, 0, 1, 1], [], []>} : vector<8x64xbf16>, vector<64x32xbf16>, vector<8x32xf32> -> vector<8x32xf32>
    %c0_15 = arith.constant 0 : index
    %c0_16 = arith.constant 0 : index
    %20 = vector.load %arg7[%c0_15, %c0_16] : memref<1x32xf32, #tpu.memory_space<vmem>>, vector<1x32xf32>
    %21 = vector.broadcast %20 : vector<1x32xf32> to vector<8x32xf32>
    %22 = arith.addf %19, %21 : vector<8x32xf32>
    %cst_17 = arith.constant 0.000000e+00 : f32
    %23 = vector.broadcast %cst_17 : f32 to vector<8x32xf32>
    %24 = arith.maximumf %22, %23 : vector<8x32xf32>
    %c0_18 = arith.constant 0 : index
    %c0_19 = arith.constant 0 : index
    %25 = vector.load %arg8[%c0_18, %c0_19] : memref<1x32xf32, #tpu.memory_space<vmem>>, vector<1x32xf32>
    %26 = vector.broadcast %25 : vector<1x32xf32> to vector<8x32xf32>
    %27 = arith.mulf %24, %26 : vector<8x32xf32>
    %cst_20 = arith.constant dense<0.000000e+00> : vector<8xf32>
    %28 = vector.multi_reduction <add>, %27, %cst_20 [1] : vector<8x32xf32> to vector<8xf32>
    %29 = vector.shape_cast %28 : vector<8xf32> to vector<8x1xf32>
    %c0_21 = arith.constant 0 : index
    %c0_22 = arith.constant 0 : index
    %30 = vector.load %arg9[%c0_21, %c0_22] : memref<1x1xf32, #tpu.memory_space<vmem>>, vector<1x1xf32>
    %31 = vector.broadcast %30 : vector<1x1xf32> to vector<8x1xf32>
    %32 = arith.addf %29, %31 : vector<8x1xf32>
    %c0_23 = arith.constant 0 : index
    %c0_24 = arith.constant 0 : index
    %33 = vector.load %arg10[%c0_23, %c0_24] : memref<8x1xf32, #tpu.memory_space<vmem>>, vector<8x1xf32>
    tpu.vector_store %arg10[%c0_23, %c0_24], %32 {strides = array<i32>} : memref<8x1xf32, #tpu.memory_space<vmem>>, vector<8x1xf32>,
    return
  }
  func.func @transform_0(%arg0: i32) -> (i32, i32) {
    %c0_i32 = arith.constant 0 : i32
    %c0_i32_0 = arith.constant 0 : i32
    return %arg0, %c0_i32 : i32, i32
  }
  func.func @transform_1(%arg0: i32) -> (i32, i32) {
    %c0_i32 = arith.constant 0 : i32
    %c0_i32_0 = arith.constant 0 : i32
    %c0_i32_1 = arith.constant 0 : i32
    return %c0_i32, %c0_i32_0 : i32, i32
  }
  func.func @transform_2(%arg0: i32) -> (i32, i32) {
    %c0_i32 = arith.constant 0 : i32
    %c0_i32_0 = arith.constant 0 : i32
    %c0_i32_1 = arith.constant 0 : i32
    return %c0_i32, %c0_i32_0 : i32, i32
  }
  func.func @transform_3(%arg0: i32) -> (i32, i32) {
    %c0_i32 = arith.constant 0 : i32
    %c0_i32_0 = arith.constant 0 : i32
    %c0_i32_1 = arith.constant 0 : i32
    return %c0_i32, %c0_i32_0 : i32, i32
  }
  func.func @transform_4(%arg0: i32) -> (i32, i32) {
    %c0_i32 = arith.constant 0 : i32
    %c0_i32_0 = arith.constant 0 : i32
    %c0_i32_1 = arith.constant 0 : i32
    return %c0_i32, %c0_i32_0 : i32, i32
  }
  func.func @transform_5(%arg0: i32) -> (i32, i32) {
    %c0_i32 = arith.constant 0 : i32
    %c0_i32_0 = arith.constant 0 : i32
    %c0_i32_1 = arith.constant 0 : i32
    return %c0_i32, %c0_i32_0 : i32, i32
  }
  func.func @transform_6(%arg0: i32) -> (i32, i32) {
    %c0_i32 = arith.constant 0 : i32
    %c0_i32_0 = arith.constant 0 : i32
    %c0_i32_1 = arith.constant 0 : i32
    return %c0_i32, %c0_i32_0 : i32, i32
  }
  func.func @transform_7(%arg0: i32) -> (i32, i32) {
    %c0_i32 = arith.constant 0 : i32
    %c0_i32_0 = arith.constant 0 : i32
    %c0_i32_1 = arith.constant 0 : i32
    return %c0_i32, %c0_i32_0 : i32, i32
  }
  func.func @transform_8(%arg0: i32) -> (i32, i32) {
    %c0_i32 = arith.constant 0 : i32
    %c0_i32_0 = arith.constant 0 : i32
    %c0_i32_1 = arith.constant 0 : i32
    return %c0_i32, %c0_i32_0 : i32, i32
  }
  func.func @transform_9(%arg0: i32) -> (i32, i32) {
    %c0_i32 = arith.constant 0 : i32
    %c0_i32_0 = arith.constant 0 : i32
    return %arg0, %c0_i32 : i32, i32
  }
}

</mosaic_0001>

<llo_original>
// kernel: tpu_custom_call.1
$region0: #{tpu_custom_call.1}
  #allocation0 [shape = 'u32[]', space=smem, size = 0x4, offset = 0x4, fixed_abs, tag = 'smem constant byte address 0x4 - core index']
  #allocation1 [shape = 'u32[144,128]{1,0:T(1,128)}', space=vmem, size = 0x12000, scoped, tag = 'internal scratch']
  #allocation2 [shape = 'f32[1,1]{1,0:T(1,128)S(1)}', space=vmem, size = 0x200, scoped, tag = 'scoped memory for tpu_custom_call.1']
  %s0 = inlined_call_operand.vmem [shape: f32[8,32], index: 0, kind: input, shape index: {}]
  %s1 = inlined_call_operand.vmem [shape: bf16[32,128], index: 1, kind: input, shape index: {}]
  %s2 = inlined_call_operand.vmem [shape: f32[1,128], index: 2, kind: input, shape index: {}]
  %s3 = inlined_call_operand.vmem [shape: bf16[128,64], index: 3, kind: input, shape index: {}]
  %s4 = inlined_call_operand.vmem [shape: f32[1,64], index: 4, kind: input, shape index: {}]
  %s5 = inlined_call_operand.vmem [shape: bf16[64,32], index: 5, kind: input, shape index: {}]
  %s6 = inlined_call_operand.vmem [shape: f32[1,32], index: 6, kind: input, shape index: {}]
  %s7 = inlined_call_operand.vmem [shape: f32[1,32], index: 7, kind: input, shape index: {}]
  %s8 = inlined_call_operand.<no memory space> [shape: f32[1,1], index: 8, kind: input, shape index: {}]
  %s9 = inlined_call_operand.vmem [shape: f32[8,1], index: 9, kind: output, shape index: {}]
  %s10 = sld [smem:[#allocation0]]
  $region46: #{tpu_custom_call.1} parent=0
    _
  %s12 = ssub.s32 1, %s10
  %s13 = scalar_select 0, %s12, %s10
  %v14 = vstv %s8
  %15 = vst [vmem:[#allocation2] sm:$0x1] %v14
  // Predicated region
  $region2: #{tpu_custom_call.1} parent=0 // pred_check
    _
  $region3: #{tpu_custom_call.1} parent=0 // pred_check_branch
    %17 = sbr.rel (0) target = $region5
  $region4: #{tpu_custom_call.1} parent=0 // pred_region
    _
  $region5: #{tpu_custom_call.1} parent=0 // pred_fallthru
    _
  // Predicated region
  $region6: #{tpu_custom_call.1} parent=0 // pred_check
    _
  $region7: #{tpu_custom_call.1} parent=0 // pred_check_branch
    %19 = sbr.rel (0) target = $region9
  $region8: #{tpu_custom_call.1} parent=0 // pred_region
    _
  $region9: #{tpu_custom_call.1} parent=0 // pred_fallthru
    _
  // Predicated region
  $region10: #{tpu_custom_call.1} parent=0 // pred_check
    _
  $region11: #{tpu_custom_call.1} parent=0 // pred_check_branch
    %21 = sbr.rel (0) target = $region13
  $region12: #{tpu_custom_call.1} parent=0 // pred_region
    _
  $region13: #{tpu_custom_call.1} parent=0 // pred_fallthru
    _
  // Predicated region
  $region14: #{tpu_custom_call.1} parent=0 // pred_check
    _
  $region15: #{tpu_custom_call.1} parent=0 // pred_check_branch
    %23 = sbr.rel (0) target = $region17
  $region16: #{tpu_custom_call.1} parent=0 // pred_region
    _
  $region17: #{tpu_custom_call.1} parent=0 // pred_fallthru
    _
  // Predicated region
  $region18: #{tpu_custom_call.1} parent=0 // pred_check
    _
  $region19: #{tpu_custom_call.1} parent=0 // pred_check_branch
    %25 = sbr.rel (0) target = $region21
  $region20: #{tpu_custom_call.1} parent=0 // pred_region
    _
  $region21: #{tpu_custom_call.1} parent=0 // pred_fallthru
    _
  // Predicated region
  $region22: #{tpu_custom_call.1} parent=0 // pred_check
    _
  $region23: #{tpu_custom_call.1} parent=0 // pred_check_branch
    %27 = sbr.rel (0) target = $region25
  $region24: #{tpu_custom_call.1} parent=0 // pred_region
    _
  $region25: #{tpu_custom_call.1} parent=0 // pred_fallthru
    _
  // Predicated region
  $region26: #{tpu_custom_call.1} parent=0 // pred_check
    _
  $region27: #{tpu_custom_call.1} parent=0 // pred_check_branch
    %29 = sbr.rel (0) target = $region29
  $region28: #{tpu_custom_call.1} parent=0 // pred_region
    _
  $region29: #{tpu_custom_call.1} parent=0 // pred_fallthru
    _
  // Predicated region
  $region30: #{tpu_custom_call.1} parent=0 // pred_check
    _
  $region31: #{tpu_custom_call.1} parent=0 // pred_check_branch
    %31 = sbr.rel (0) target = $region33
  $region32: #{tpu_custom_call.1} parent=0 // pred_region
    _
  $region33: #{tpu_custom_call.1} parent=0 // pred_fallthru
    _
  // Predicated region
  $region34: #{tpu_custom_call.1} parent=0 // pred_check
    _
  $region35: #{tpu_custom_call.1} parent=0 // pred_check_branch
    %33 = sbr.rel (0) target = $region37
  $region36: #{tpu_custom_call.1} parent=0 // pred_region
    _
  $region37: #{tpu_custom_call.1} parent=0 // pred_fallthru
    _
  %v35 = vld [vmem:[%s0] sm:$0xff]
  %v36 = vpack.c.bf16 %v35, %v35
  %v37 = vld [vmem:[%s1] sm:$0xf]
  %v38 = vld [vmem:[%s1 + $0x4] sm:$0xf]
  %v39 = vld [vmem:[%s1 + $0x8] sm:$0xf]
  %v40 = vld [vmem:[%s1 + $0xc] sm:$0xf]
  %v41 = vld [vmem:[%s2] sm:$0x1]
  %v43 = vlaneseq
  %v44 = vshrl.u32 %v43, 7
  %v45 = vsub.s32 0, %v44
  %v46 = vrot.slane %v41, %v45
  %v52 = vunpack.c.l.b16 %v37
  %v53 = vunpack.c.l.b16 %v38
  %v54 = vunpack.c.l.b16 %v39
  %v55 = vunpack.c.l.b16 %v40
  %v56 = vpack.c.b16 %v53, %v52
  %v57 = vpack.c.b16 %v55, %v54
  %vm60 = vcmask 261120
  %v62 = vsel %vm60, %v36, 0
  %64 = vmatprep.subr.bf16.mxu0 0
  %65 = vmatpush1.bf16.msra.mxu0 %v56
  %66 = vmatprep.subr.bf16.mxu0 0
  %67 = vmatpush1.bf16.msra.mxu0 %v57
  %68 = vmatprep.subr.bf16.mxu0 0
  %69 = vmatpush1.bf16.msra.mxu0 0
  %70 = vmatprep.subr.bf16.mxu0 0
  %71 = vmatpush1.bf16.msra.mxu0 0
  %72 = vmatprep.subr.bf16.mxu0 0
  %73 = vmatpush1.bf16.msra.mxu0 0
  %74 = vmatprep.subr.bf16.mxu0 0
  %75 = vmatpush1.bf16.msra.mxu0 0
  %76 = vmatprep.subr.bf16.mxu0 0
  %77 = vmatpush1.bf16.msra.mxu0 0
  %78 = vmatprep.subr.bf16.mxu0 0
  %79 = vmatpush1.bf16.msra.mxu0 0
  %80 = vmatprep.subr.bf16.mxu0 0
  %81 = vmatpush1.bf16.msra.mxu0 0
  %82 = vmatprep.subr.bf16.mxu0 0
  %83 = vmatpush1.bf16.msra.mxu0 0
  %84 = vmatprep.subr.bf16.mxu0 0
  %85 = vmatpush1.bf16.msra.mxu0 0
  %86 = vmatprep.subr.bf16.mxu0 0
  %87 = vmatpush1.bf16.msra.mxu0 0
  %88 = vmatprep.subr.bf16.mxu0 0
  %89 = vmatpush1.bf16.msra.mxu0 0
  %90 = vmatprep.subr.bf16.mxu0 0
  %91 = vmatpush1.bf16.msra.mxu0 0
  %92 = vmatprep.subr.bf16.mxu0 0
  %93 = vmatpush1.bf16.msra.mxu0 0
  %94 = vmatprep.subr.bf16.mxu0 0
  %95 = vmatpush1.bf16.msra.mxu0 0
  %96 = vmatprep.mubr.bf16.mxu0 0
  %97 = vmatmul.mubr.bf16.gmra.mrb[0].mxu0 %v62
  %v98 = vpop.f32.mrb[0].mxu0
  %v99 = vadd.f32 %v46, %v98
  %v100 = vpop.f32.mrb[0].mxu0
  %v101 = vpop.f32.mrb[0].mxu0
  %v102 = vpop.f32.mrb[0].mxu0
  %103 = vdwg.mxu0
  %v104 = vmax.f32 %v99, 0.0
  %v105 = vpack.c.bf16 %v104, %v104
  %v106 = vld [vmem:[%s3] sm:$0xf]
  %v107 = vld [vmem:[%s3 + $0x4] sm:$0xf]
  %v108 = vld [vmem:[%s3 + $0x8] sm:$0xf]
  %v109 = vld [vmem:[%s3 + $0xc] sm:$0xf]
  %v110 = vld [vmem:[%s3 + $0x10] sm:$0xf]
  %v111 = vld [vmem:[%s3 + $0x14] sm:$0xf]
  %v112 = vld [vmem:[%s3 + $0x18] sm:$0xf]
  %v113 = vld [vmem:[%s3 + $0x1c] sm:$0xf]
  %v114 = vld [vmem:[%s3 + $0x20] sm:$0xf]
  %v115 = vld [vmem:[%s3 + $0x24] sm:$0xf]
  %v116 = vld [vmem:[%s3 + $0x28] sm:$0xf]
  %v117 = vld [vmem:[%s3 + $0x2c] sm:$0xf]
  %v118 = vld [vmem:[%s3 + $0x30] sm:$0xf]
  %v119 = vld [vmem:[%s3 + $0x34] sm:$0xf]
  %v120 = vld [vmem:[%s3 + $0x38] sm:$0xf]
  %v121 = vld [vmem:[%s3 + $0x3c] sm:$0xf]
  %v122 = vld [vmem:[%s4] sm:$0x1]
  %v124 = vlaneseq
  %v125 = vshrl.u32 %v124, 7
  %v126 = vsub.s32 0, %v125
  %v127 = vrot.slane %v122, %v126
  %v145 = vunpack.c.l.b16 %v106
  %v146 = vunpack.c.l.b16 %v107
  %v147 = vunpack.c.l.b16 %v108
  %v148 = vunpack.c.l.b16 %v109
  %v149 = vunpack.c.l.b16 %v110
  %v150 = vunpack.c.l.b16 %v111
  %v151 = vunpack.c.l.b16 %v112
  %v152 = vunpack.c.l.b16 %v113
  %v153 = vunpack.c.l.b16 %v114
  %v154 = vunpack.c.l.b16 %v115
  %v155 = vunpack.c.l.b16 %v116
  %v156 = vunpack.c.l.b16 %v117
  %v157 = vunpack.c.l.b16 %v118
  %v158 = vunpack.c.l.b16 %v119
  %v159 = vunpack.c.l.b16 %v120
  %v160 = vunpack.c.l.b16 %v121
  %v161 = vpack.c.b16 %v146, %v145
  %v162 = vpack.c.b16 %v148, %v147
  %v163 = vpack.c.b16 %v150, %v149
  %v164 = vpack.c.b16 %v152, %v151
  %v165 = vpack.c.b16 %v154, %v153
  %v166 = vpack.c.b16 %v156, %v155
  %v167 = vpack.c.b16 %v158, %v157
  %v168 = vpack.c.b16 %v160, %v159
  %177 = vmatprep.subr.bf16.mxu0 0
  %178 = vmatpush1.bf16.msra.mxu0 %v161
  %179 = vmatprep.subr.bf16.mxu0 0
  %180 = vmatpush1.bf16.msra.mxu0 %v162
  %181 = vmatprep.subr.bf16.mxu0 0
  %182 = vmatpush1.bf16.msra.mxu0 %v163
  %183 = vmatprep.subr.bf16.mxu0 0
  %184 = vmatpush1.bf16.msra.mxu0 %v164
  %185 = vmatprep.subr.bf16.mxu0 0
  %186 = vmatpush1.bf16.msra.mxu0 %v165
  %187 = vmatprep.subr.bf16.mxu0 0
  %188 = vmatpush1.bf16.msra.mxu0 %v166
  %189 = vmatprep.subr.bf16.mxu0 0
  %190 = vmatpush1.bf16.msra.mxu0 %v167
  %191 = vmatprep.subr.bf16.mxu0 0
  %192 = vmatpush1.bf16.msra.mxu0 %v168
  %193 = vmatprep.subr.bf16.mxu0 0
  %194 = vmatpush1.bf16.msra.mxu0 0
  %195 = vmatprep.subr.bf16.mxu0 0
  %196 = vmatpush1.bf16.msra.mxu0 0
  %197 = vmatprep.subr.bf16.mxu0 0
  %198 = vmatpush1.bf16.msra.mxu0 0
  %199 = vmatprep.subr.bf16.mxu0 0
  %200 = vmatpush1.bf16.msra.mxu0 0
  %201 = vmatprep.subr.bf16.mxu0 0
  %202 = vmatpush1.bf16.msra.mxu0 0
  %203 = vmatprep.subr.bf16.mxu0 0
  %204 = vmatpush1.bf16.msra.mxu0 0
  %205 = vmatprep.subr.bf16.mxu0 0
  %206 = vmatpush1.bf16.msra.mxu0 0
  %207 = vmatprep.subr.bf16.mxu0 0
  %208 = vmatpush1.bf16.msra.mxu0 0
  %209 = vmatprep.mubr.bf16.mxu0 0
  %210 = vmatmul.mubr.bf16.gmra.mrb[0].mxu0 %v105
  %v211 = vpop.f32.mrb[0].mxu0
  %v212 = vadd.f32 %v127, %v211
  %v213 = vpop.f32.mrb[0].mxu0
  %v214 = vpop.f32.mrb[0].mxu0
  %v215 = vpop.f32.mrb[0].mxu0
  %216 = vdwg.mxu0
  %v217 = vmax.f32 %v212, 0.0
  %v218 = vpack.c.bf16 %v217, %v217
  %v219 = vld [vmem:[%s5] sm:$0xf]
  %v220 = vld [vmem:[%s5 + $0x4] sm:$0xf]
  %v221 = vld [vmem:[%s5 + $0x8] sm:$0xf]
  %v222 = vld [vmem:[%s5 + $0xc] sm:$0xf]
  %v223 = vld [vmem:[%s5 + $0x10] sm:$0xf]
  %v224 = vld [vmem:[%s5 + $0x14] sm:$0xf]
  %v225 = vld [vmem:[%s5 + $0x18] sm:$0xf]
  %v226 = vld [vmem:[%s5 + $0x1c] sm:$0xf]
  %v227 = vld [vmem:[%s6] sm:$0x1]
  %v229 = vlaneseq
  %v230 = vshrl.u32 %v229, 7
  %v231 = vsub.s32 0, %v230
  %v232 = vrot.slane %v227, %v231
  %v242 = vunpack.c.l.b16 %v219
  %v243 = vunpack.c.l.b16 %v220
  %v244 = vunpack.c.l.b16 %v221
  %v245 = vunpack.c.l.b16 %v222
  %v246 = vunpack.c.l.b16 %v223
  %v247 = vunpack.c.l.b16 %v224
  %v248 = vunpack.c.l.b16 %v225
  %v249 = vunpack.c.l.b16 %v226
  %v250 = vpack.c.b16 %v243, %v242
  %v251 = vpack.c.b16 %v245, %v244
  %v252 = vpack.c.b16 %v247, %v246
  %v253 = vpack.c.b16 %v249, %v248
  %vm258 = vcmask 523264
  %v260 = vsel %vm258, %v218, 0
  %262 = vmatprep.subr.bf16.mxu0 0
  %263 = vmatpush1.bf16.msra.mxu0 %v250
  %264 = vmatprep.subr.bf16.mxu0 0
  %265 = vmatpush1.bf16.msra.mxu0 %v251
  %266 = vmatprep.subr.bf16.mxu0 0
  %267 = vmatpush1.bf16.msra.mxu0 %v252
  %268 = vmatprep.subr.bf16.mxu0 0
  %269 = vmatpush1.bf16.msra.mxu0 %v253
  %270 = vmatprep.subr.bf16.mxu0 0
  %271 = vmatpush1.bf16.msra.mxu0 0
  %272 = vmatprep.subr.bf16.mxu0 0
  %273 = vmatpush1.bf16.msra.mxu0 0
  %274 = vmatprep.subr.bf16.mxu0 0
  %275 = vmatpush1.bf16.msra.mxu0 0
  %276 = vmatprep.subr.bf16.mxu0 0
  %277 = vmatpush1.bf16.msra.mxu0 0
  %278 = vmatprep.subr.bf16.mxu0 0
  %279 = vmatpush1.bf16.msra.mxu0 0
  %280 = vmatprep.subr.bf16.mxu0 0
  %281 = vmatpush1.bf16.msra.mxu0 0
  %282 = vmatprep.subr.bf16.mxu0 0
  %283 = vmatpush1.bf16.msra.mxu0 0
  %284 = vmatprep.subr.bf16.mxu0 0
  %285 = vmatpush1.bf16.msra.mxu0 0
  %286 = vmatprep.subr.bf16.mxu0 0
  %287 = vmatpush1.bf16.msra.mxu0 0
  %288 = vmatprep.subr.bf16.mxu0 0
  %289 = vmatpush1.bf16.msra.mxu0 0
  %290 = vmatprep.subr.bf16.mxu0 0
  %291 = vmatpush1.bf16.msra.mxu0 0
  %292 = vmatprep.subr.bf16.mxu0 0
  %293 = vmatpush1.bf16.msra.mxu0 0
  %294 = vmatprep.mubr.bf16.mxu0 0
  %295 = vmatmul.mubr.bf16.gmra.mrb[0].mxu0 %v260
  %v296 = vpop.f32.mrb[0].mxu0
  %v297 = vadd.f32 %v232, %v296
  %v298 = vpop.f32.mrb[0].mxu0
  %v299 = vpop.f32.mrb[0].mxu0
  %v300 = vpop.f32.mrb[0].mxu0
  %301 = vdwg.mxu0
  %v302 = vmax.f32 %v297, 0.0
  %v303 = vld [vmem:[%s7] sm:$0x1]
  %v305 = vlaneseq
  %v306 = vshrl.u32 %v305, 7
  %v307 = vsub.s32 0, %v306
  %v308 = vrot.slane %v303, %v307
  %v310 = vmul.f32 %v302, %v308
  %v311 = vsel %vm60, %v310, 0.0
  %312 = vadd.xlane.f32.xlu0 %v311
  %v313 = vpop.xlane.xlu0 %312
  %v314 = vld [vmem:[#allocation2] sm:$0x1]
  %v316 = vlaneseq
  %v317 = vshrl.u32 %v316, 7
  %v318 = vsub.s32 0, %v317
  %v319 = vrot.slane %v314, %v318
  %v321 = vadd.f32 %v313, %v319
  %vm322 = vcmask 7168
  %323 = vst.msk [vmem:[%s9] sm:$0xff] %vm322, %v321
  // Predicated region
  $region38: #{tpu_custom_call.1} parent=0 // pred_check
    _
  $region39: #{tpu_custom_call.1} parent=0 // pred_check_branch
    %325 = sbr.rel (0) target = $region41
  $region40: #{tpu_custom_call.1} parent=0 // pred_region
    _
  $region41: #{tpu_custom_call.1} parent=0 // pred_fallthru
    _
  // Predicated region
  $region42: #{tpu_custom_call.1} parent=0 // pred_check
    _
  $region43: #{tpu_custom_call.1} parent=0 // pred_check_branch
    %327 = sbr.rel (0) target = $region45
  $region44: #{tpu_custom_call.1} parent=0 // pred_region
    _
  $region45: #{tpu_custom_call.1} parent=0 // pred_fallthru
    _

</llo_original>
